<compile_context>
chip_gen: v7x
topology: tpu7x:2x2x1
jax: 0.10.0
libtpu: 0.0.40
codegen_flags: <defaults>
</compile_context>

<pallas_src>
import functools

import jax
import jax.numpy as jnp
import numpy as np
from jax.experimental import pallas as pl
from jax.experimental.pallas import tpu as pltpu

_LANES = 128
_ROW = 3 * _LANES            # 384 interleaved values = 128 whole RGB pixels / row
_ROLL_IS_JNP = None          # lazily-detected pltpu.roll sign convention


def _roll_probe_kernel(x_ref, o_ref):
    o_ref[...] = pltpu.roll(x_ref[...], 1, axis=1)


def _roll_follows_jnp():
    """One-time probe: does pltpu.roll follow jnp.roll's sign convention?"""
    global _ROLL_IS_JNP
    if _ROLL_IS_JNP is None:
        x = jnp.arange(8 * _LANES, dtype=jnp.float32).reshape(8, _LANES)
        y = pl.pallas_call(
            _roll_probe_kernel,
            out_shape=jax.ShapeDtypeStruct((8, _LANES), jnp.float32),
        )(x)
        _ROLL_IS_JNP = bool(jnp.array_equal(y, jnp.roll(x, 1, axis=1)))
    return _ROLL_IS_JNP


def _post_process_kernel(img_ref, alpha_ref, coef_ref, expand_ref, out_ref, *,
                         compute_dtype, apply_matrix, split_alpha, roll_is_jnp):
    """One (camera, row-tile) grid step, fully interleaved NHWC layout.

    img_ref    : VMEM [1, S, 384]  interleaved RGB rows (128 pixels per row)
    alpha_ref  : VMEM [1, S, 128]  per-pixel alpha rows (compact)
    coef_ref   : VMEM [1, 6, 384]  per-lane coefs for shifts d=-2..+2 + background
    expand_ref : VMEM [128, 384]   0/1 alpha expansion matrix (pixel -> 3 lanes)
    out_ref    : VMEM [1, S, 384]  blended interleaved RGB rows
    """
    x = img_ref[0].astype(compute_dtype)             # (S, 384)
    p = expand_ref[...]                              # (128, 384) bf16 0/1

    # ---- alpha expansion on the otherwise-idle MXU: a3[l] = alpha[l // 3] ----
    if split_alpha:
        # exact f32 expansion via bf16 hi/lo split (MXU-precision independent)
        a32 = alpha_ref[0].astype(jnp.float32)
        a_hi = a32.astype(jnp.bfloat16)
        a_lo = (a32 - a_hi.astype(jnp.float32)).astype(jnp.bfloat16)
        a3 = (jnp.dot(a_hi, p, preferred_element_type=jnp.float32)
              + jnp.dot(a_lo, p, preferred_element_type=jnp.float32))
    else:
        a3 = jnp.dot(alpha_ref[0].astype(jnp.bfloat16), p,
                     preferred_element_type=jnp.float32)
    a3 = a3.astype(compute_dtype)                    # (S, 384)

    # ---- fused 3x3 color correction in interleaved space (lane rolls) -------
    if apply_matrix:
        n = x.shape[-1]

        def shifted(v, d):                           # lane l -> v[l + d] per row
            amt = (-d) % n if roll_is_jnp else d % n
            return pltpu.roll(v, amt, axis=1)

        # coef rows: 0:d=-2, 1:d=-1, 2:d=0, 3:d=+1, 4:d=+2 (zeros at lanes
        # where the shift would wrap, so row-wraparound garbage never leaks).
        corrected = coef_ref[0, 2] * x
        corrected = corrected + coef_ref[0, 3] * shifted(x, 1)
        corrected = corrected + coef_ref[0, 4] * shifted(x, 2)
        corrected = corrected + coef_ref[0, 1] * shifted(x, -1)
        corrected = corrected + coef_ref[0, 0] * shifted(x, -2)
    else:
        corrected = x

    bgv = coef_ref[0, 5]                             # (384,) background per lane
    out = a3 * (corrected - bgv) + bgv               # reassociated blend
    out_ref[0] = out.astype(out_ref.dtype)


def post_process(render_images,            # [cam, H, W, 3]
                 render_alphas,            # [cam, H, W, 1]
                 background,               # [3]
                 color_correction=None,    # [cam or 1, 3, 3] | None
                 camera_indices=None,      # i32[cam] | None
                 learnable_cc_params=None, # [num_train_cams, 3, 3] | None
                 camera_color_correction=True,
                 infos=None,
                 block_rows=512,           # sublane rows (of 128 pixels) per tile
                 bf16_compute=True,        # compute in bf16 when I/O is bf16
                 donate_render_images=False):
    """JAX wrapper reproducing PostProcessor.forward."""
    cam, H, W, _ = render_images.shape
    hw = H * W
    io_dtype = render_images.dtype
    compute_dtype = (jnp.bfloat16
                     if (bf16_compute and io_dtype == jnp.bfloat16)
                     else jnp.float32)

    # ---- fuse the two 3x3 corrections into one per-camera matrix (L @ CC) ----
    has_cc = color_correction is not None and camera_color_correction
    has_lcc = learnable_cc_params is not None and camera_indices is not None
    apply_matrix = has_cc or has_lcc
    fused = jnp.broadcast_to(jnp.eye(3, dtype=jnp.float32), (cam, 3, 3))
    if has_cc:
        fused = jnp.broadcast_to(color_correction.astype(jnp.float32), (cam, 3, 3))
    if has_lcc:
        # TODO(synk): LearnableColorCorrection source not provided; assumed to be
        # per-train-camera learnable 3x3 matrices applied to RGB after CC.
        L = learnable_cc_params.astype(jnp.float32)[camera_indices]   # (cam,3,3)
        fused = jnp.einsum('cij,cjk->cik', L, fused)

    # ---- per-lane coefficient table (cam, 6, 384): shifts d=-2..+2 + bg ------
    lane = jnp.arange(_ROW)
    c_l = lane % 3                                   # channel of each lane
    rows = []
    for d in (-2, -1, 0, 1, 2):
        j = c_l + d
        valid = (j >= 0) & (j <= 2)
        vals = fused[:, c_l, jnp.clip(j, 0, 2)]      # (cam, 384): M[c, c+d]
        rows.append(jnp.where(valid[None, :], vals, 0.0))
    bg = background.astype(jnp.float32)
    rows.append(jnp.broadcast_to(bg[c_l][None, :], (cam, _ROW)))
    coef = jnp.stack(rows, axis=1).astype(compute_dtype)   # (cam, 6, 384)

    # ---- constant 0/1 alpha expansion matrix: P[p, 3p+j] = 1 -----------------
    p_idx = jnp.arange(_LANES)
    expand = (lane[None, :] // 3 == p_idx[:, None]).astype(jnp.bfloat16)  # (128,384)

    # ---- layout: free reshapes of the NHWC buffer (pad only if unaligned) ----
    n_rows = pl.cdiv(hw, _LANES)
    hw_pad = n_rows * _LANES
    img3 = render_images.reshape(cam, hw, 3)
    alp = render_alphas.reshape(cam, hw)
    if hw_pad != hw:
        # TODO(synk): extra HBM pass for non-128-aligned pixel counts; keep
        # H*W % 128 == 0 upstream to stay at the 1-read/1-write roofline.
        img3 = jnp.pad(img3, ((0, 0), (0, hw_pad - hw), (0, 0)))
        alp = jnp.pad(alp, ((0, 0), (0, hw_pad - hw)))
    img_rows = img3.reshape(cam, n_rows, _ROW)       # (cam, hw/128, 384)
    alp_rows = alp.reshape(cam, n_rows, _LANES)      # (cam, hw/128, 128)

    # ---- single flattened parallel grid axis (v7x megacore balance) ----------
    S = n_rows if n_rows <= block_rows else block_rows
    n_tiles = pl.cdiv(n_rows, S)
    grid = (cam * n_tiles,)

    kernel = functools.partial(
        _post_process_kernel,
        compute_dtype=compute_dtype,
        apply_matrix=apply_matrix,
        split_alpha=(render_alphas.dtype != jnp.bfloat16),
        roll_is_jnp=_roll_follows_jnp() if apply_matrix else True)

    out_rows = pl.pallas_call(
        kernel,
        out_shape=jax.ShapeDtypeStruct((cam, n_rows, _ROW), io_dtype),
        grid=grid,
        in_specs=[
            pl.BlockSpec((1, S, _ROW), lambda i: (i // n_tiles, i % n_tiles, 0)),
            pl.BlockSpec((1, S, _LANES), lambda i: (i // n_tiles, i % n_tiles, 0)),
            pl.BlockSpec((1, 6, _ROW), lambda i: (i // n_tiles, 0, 0)),
            pl.BlockSpec((_LANES, _ROW), lambda i: (0, 0)),
        ],
        out_specs=pl.BlockSpec((1, S, _ROW), lambda i: (i // n_tiles, i % n_tiles, 0)),
        compiler_params=pltpu.CompilerParams(dimension_semantics=("parallel",)),
        input_output_aliases=({0: 0} if donate_render_images else {}),
    )(img_rows, alp_rows, coef, expand)

    images = out_rows.reshape(cam, hw_pad, 3)
    if hw_pad != hw:
        images = images[:, :hw, :]
    images = images.reshape(cam, H, W, 3)

    alphas = render_alphas                           # pure passthrough
    if infos is None:
        infos = {}
    infos['raw_rendered_images'] = images
    infos['raw_rendered_alphas'] = alphas
    # TODO(synk): screen_space_denoiser not ported (raises in the original too).
    return images, alphas, infos


def _reference(render_images, render_alphas, background, color_correction,
               camera_indices, learnable_cc_params, camera_color_correction=True):
    """Pure-JAX reference mirroring the PyTorch forward (f32)."""
    img = render_images.astype(jnp.float32)
    alp = render_alphas.astype(jnp.float32)
    cam = img.shape[0]
    if color_correction is not None and camera_color_correction:
        cc = jnp.broadcast_to(color_correction.astype(jnp.float32), (cam, 3, 3))
        img = jnp.einsum('cij,chwj->chwi', cc, img)
    if learnable_cc_params is not None and camera_indices is not None:
        L = learnable_cc_params.astype(jnp.float32)[camera_indices]
        img = jnp.einsum('cij,chwj->chwi', L, img)
    bg = jnp.broadcast_to(background.astype(jnp.float32), img.shape)
    img = img * alp + (1.0 - alp) * bg
    return img, render_alphas


if __name__ == "__main__":
    key = jax.random.PRNGKey(0)
    k_img, k_alp, k_bg, k_cc = jax.random.split(key, 4)

    background = jax.random.uniform(k_bg, (3,), dtype=jnp.float32)

    # ------------- test 1: both corrections, f32, multi-camera ---------------
    CAM, H, W = 2, 16, 16            # hw = 256 -> 2 interleaved rows of 384
    NUM_TRAIN_CAMS = 4
    render_images = jax.random.uniform(k_img, (CAM, H, W, 3), dtype=jnp.float32)
    render_alphas = jax.random.uniform(k_alp, (CAM, H, W, 1), dtype=jnp.float32)
    color_correction = (jnp.tile(jnp.eye(3, dtype=jnp.float32)[None], (CAM, 1, 1))
                        + 0.05 * jax.random.normal(k_cc, (CAM, 3, 3), dtype=jnp.float32))
    learnable_cc_params = (jnp.tile(jnp.eye(3, dtype=jnp.float32)[None], (NUM_TRAIN_CAMS, 1, 1))
                           + 0.01 * jnp.arange(NUM_TRAIN_CAMS * 9, dtype=jnp.float32)
                           .reshape(NUM_TRAIN_CAMS, 3, 3) / (NUM_TRAIN_CAMS * 9))
    camera_indices = jnp.array([0, 2], dtype=jnp.int32)

    images, alphas, infos = post_process(
        render_images, render_alphas, background,
        color_correction=color_correction,
        camera_indices=camera_indices,
        learnable_cc_params=learnable_cc_params)
    jax.block_until_ready(images)
    jax.block_until_ready(alphas)

    ref_img, ref_alp = _reference(render_images, render_alphas, background,
                                  color_correction, camera_indices,
                                  learnable_cc_params)
    assert images.shape == (CAM, H, W, 3) and alphas.shape == (CAM, H, W, 1)
    np.testing.assert_allclose(np.asarray(images), np.asarray(ref_img),
                               atol=2e-5, rtol=2e-5)
    np.testing.assert_allclose(np.asarray(alphas), np.asarray(ref_alp),
                               atol=0, rtol=0)
    assert 'raw_rendered_images' in infos and 'raw_rendered_alphas' in infos

    # ---- test 2: multi-tile grid with partial last block, no correction -----
    k2a, k2b = jax.random.split(jax.random.PRNGKey(1), 2)
    CAM2, H2, W2 = 1, 48, 96          # hw = 4608 -> 36 rows; block_rows=8 -> 5 tiles
    imgs2 = jax.random.uniform(k2a, (CAM2, H2, W2, 3), dtype=jnp.float32)
    alps2 = jax.random.uniform(k2b, (CAM2, H2, W2, 1), dtype=jnp.float32)
    images2, _, _ = post_process(imgs2, alps2, background, block_rows=8)
    jax.block_until_ready(images2)
    ref2, _ = _reference(imgs2, alps2, background, None, None, None)
    np.testing.assert_allclose(np.asarray(images2), np.asarray(ref2),
                               atol=2e-5, rtol=2e-5)

    # ---------------- test 3: bf16 I/O + bf16 compute, corrections -----------
    k3a, k3b = jax.random.split(jax.random.PRNGKey(2), 2)
    CAM3, H3, W3 = 2, 16, 24          # hw = 384 -> 3 rows
    imgs3 = jax.random.uniform(k3a, (CAM3, H3, W3, 3),
                               dtype=jnp.float32).astype(jnp.bfloat16)
    alps3 = jax.random.uniform(k3b, (CAM3, H3, W3, 1),
                               dtype=jnp.float32).astype(jnp.bfloat16)
    images3, _, _ = post_process(
        imgs3, alps3, background,
        color_correction=color_correction,
        camera_indices=camera_indices,
        learnable_cc_params=learnable_cc_params)
    jax.block_until_ready(images3)
    ref3, _ = _reference(imgs3, alps3, background, color_correction,
                         camera_indices, learnable_cc_params)
    assert images3.dtype == jnp.bfloat16
    np.testing.assert_allclose(np.asarray(images3, dtype=np.float32),
                               np.asarray(ref3), atol=2e-2, rtol=2e-2)

    # ---------- test 4: non-128-aligned pixel count (padded path) ------------
    k4a, k4b = jax.random.split(jax.random.PRNGKey(3), 2)
    CAM4, H4, W4 = 1, 12, 12          # hw = 144, not a multiple of 128
    imgs4 = jax.random.uniform(k4a, (CAM4, H4, W4, 3), dtype=jnp.float32)
    alps4 = jax.random.uniform(k4b, (CAM4, H4, W4, 1), dtype=jnp.float32)
    cc4 = (jnp.eye(3, dtype=jnp.float32)[None]
           + 0.03 * jax.random.normal(jax.random.PRNGKey(4), (CAM4, 3, 3),
                                      dtype=jnp.float32))
    images4, _, _ = post_process(imgs4, alps4, background, color_correction=cc4)
    jax.block_until_ready(images4)
    ref4, _ = _reference(imgs4, alps4, background, cc4, None, None)
    np.testing.assert_allclose(np.asarray(images4), np.asarray(ref4),
                               atol=2e-5, rtol=2e-5)

    print("KERNEL_OK")
</pallas_src>

<mosaic_0001>
module attributes {stable_mosaic.version = 11 : i64} {
  func.func @_roll_probe_kernel(%arg0: memref<8x128xf32, #tpu.memory_space<vmem>>, %arg1: memref<8x128xf32, #tpu.memory_space<vmem>>) attributes {dimension_semantics = [], scalar_prefetch = 0 : i64, scratch_operands = 0 : i64, tpu.core_type = #tpu.core_type<tc>} {
    %c0 = arith.constant 0 : index
    %c0_0 = arith.constant 0 : index
    %0 = vector.load %arg0[%c0, %c0_0] : memref<8x128xf32, #tpu.memory_space<vmem>>, vector<8x128xf32>
    %c1_i32 = arith.constant 1 : i32
    %1 = tpu.dynamic_rotate %0 by %c1_i32 dim 1 : vector<8x128xf32>, i32 -> vector<8x128xf32>
    %c0_1 = arith.constant 0 : index
    %c0_2 = arith.constant 0 : index
    %2 = vector.load %arg1[%c0_1, %c0_2] : memref<8x128xf32, #tpu.memory_space<vmem>>, vector<8x128xf32>
    tpu.vector_store %arg1[%c0_1, %c0_2], %1 {strides = array<i32>} : memref<8x128xf32, #tpu.memory_space<vmem>>, vector<8x128xf32>,
    return
  }
}

</mosaic_0001>

<llo_original>
// kernel: tpu_custom_call.1
$region0: #{tpu_custom_call.1}
  #allocation0 [shape = 'u32[]', space=smem, size = 0x4, offset = 0x4, fixed_abs, tag = 'smem constant byte address 0x4 - core index']
  #allocation1 [shape = 'u32[144,128]{1,0:T(1,128)}', space=vmem, size = 0x12000, scoped, tag = 'internal scratch']
  %s0 = inlined_call_operand.hbm [shape: f32[8,128], index: 0, kind: input, shape index: {}]
  %s1 = inlined_call_operand.hbm [shape: f32[8,128], index: 1, kind: output, shape index: {}]
  %s2 = sld [smem:[#allocation0]]
  $region18: #{tpu_custom_call.1} parent=0
    _
  %s4 = ssub.s32 1, %s2
  %s5 = scalar_select 0, %s4, %s2
  $region1: #{tpu_custom_call.1} parent=0
    #allocation2 [shape = 'u8[4096]{0}', space=vmem, size = 0x1000, scoped, tag = 'input window, operand 0, single buffered']
    #allocation3 [shape = 's32[1]{0}', space=sflag, size = 0x4, scoped, tag = 'scoped memory for tpu_custom_call.1']
    #allocation4 [shape = 's32[1]{0}', space=sflag, size = 0x4, scoped, tag = 'scoped memory for tpu_custom_call.1']
    #allocation5 [shape = 'u8[4096]{0}', space=vmem, size = 0x1000, scoped, tag = 'output window, operand 0, single buffered']
    %6 = vsyncpa [#allocation3], 0
    %7 = vsyncpa [#allocation4], 0
    // Predicated region
    $region2: #{tpu_custom_call.1} parent=1 // pred_check
      _
    $region3: #{tpu_custom_call.1} parent=1 // pred_check_branch
      %9 = sbr.rel (0) target = $region5
    $region4: #{tpu_custom_call.1} parent=1 // pred_region
      %s11 = ssub.s32 128, 128
      %12 = vsyncadd [#allocation3], %s11
      %s14 = sshll.u32 [#allocation2], 4
      %s15 = int_to_ptr.vmem [resolvable:$true] %s14
      %17 = dma.hbm_to_vmem [thread:$0]  %s0, 128, %s15, [#allocation3]
    $region5: #{tpu_custom_call.1} parent=1 // pred_fallthru
      _
    // Predicated region
    $region6: #{tpu_custom_call.1} parent=1 // pred_check
      _
    $region7: #{tpu_custom_call.1} parent=1 // pred_check_branch
      %19 = sbr.rel (0) target = $region9
    $region8: #{tpu_custom_call.1} parent=1 // pred_region
      %20 = dma.done [#allocation3], 128
    $region9: #{tpu_custom_call.1} parent=1 // pred_fallthru
      _
    %v21 = vld [vmem:[#allocation2] sm:$0xff]
    %22 = vrot.lane.b32.xlu0 %v21, 1
    %v23 = vpop.permute.xlu0 %22
    %24 = vst [vmem:[#allocation5] sm:$0xff] %v23
    // Predicated region
    $region10: #{tpu_custom_call.1} parent=1 // pred_check
      _
    $region11: #{tpu_custom_call.1} parent=1 // pred_check_branch
      %26 = sbr.rel (0) target = $region13
    $region12: #{tpu_custom_call.1} parent=1 // pred_region
      %s28 = ssub.s32 128, 128
      %29 = vsyncadd [#allocation4], %s28
      %s31 = sshll.u32 [#allocation5], 4
      %s32 = int_to_ptr.vmem [resolvable:$true] %s31
      %34 = dma.vmem_to_hbm [thread:$0]  %s32, 128, %s1, [#allocation4]
    $region13: #{tpu_custom_call.1} parent=1 // pred_fallthru
      _
    // Predicated region
    $region14: #{tpu_custom_call.1} parent=1 // pred_check
      _
    $region15: #{tpu_custom_call.1} parent=1 // pred_check_branch
      %36 = sbr.rel (0) target = $region17
    $region16: #{tpu_custom_call.1} parent=1 // pred_region
      %37 = dma.done [#allocation4], 128
    $region17: #{tpu_custom_call.1} parent=1 // pred_fallthru
      _
    %38 = vsyncpa [#allocation3], 1
    %39 = vsyncpa [#allocation4], 1

</llo_original>
